<compile_context>
chip_gen: v7x
topology: tpu7x:2x2x1
jax: 0.10.0
libtpu: 0.0.40
codegen_flags: <defaults>
</compile_context>

<pallas_src>
import jax
import jax.numpy as jnp
from jax.experimental import pallas as pl
from jax.experimental.pallas import tpu as pltpu


def _alarmnet_kernel(x_ref,
                     w1_ref, b1_ref,
                     w2_ref, b2_ref,
                     w3_ref, b3_ref,
                     w4_ref, b4_ref,
                     o_ref):
    """Fused 4-layer MLP forward in batch-on-lanes orientation.

    All activations are (hidden, batch_tile): batch sits on the 128-lane axis, so
    bias-add / ReLU / sigmoid run at full lane utilization and the final layer emits a
    lane-dense (1, batch_tile) row with no transpose. Matmul inputs are bf16 with f32
    MXU accumulation; elementwise math stays in f32 for accuracy.
    """
    cd = w1_ref.dtype                                   # compute dtype for matmul inputs (bf16)

    x = x_ref[...].astype(cd)                           # (F, bt): f32 stream -> bf16 in-kernel

    # Layer 1: Linear(F -> H1) + ReLU           -> (H1, bt)
    h = jnp.dot(w1_ref[...], x, preferred_element_type=jnp.float32) + b1_ref[...]
    h = jnp.maximum(h, 0.0)

    # Layer 2: Linear(H1 -> H2) + ReLU          -> (H2, bt)
    h = jnp.dot(w2_ref[...], h.astype(cd), preferred_element_type=jnp.float32) + b2_ref[...]
    h = jnp.maximum(h, 0.0)

    # Layer 3: Linear(H2 -> H3) + ReLU          -> (H3, bt)
    h = jnp.dot(w3_ref[...], h.astype(cd), preferred_element_type=jnp.float32) + b3_ref[...]
    h = jnp.maximum(h, 0.0)

    # Output layer: Linear(H3 -> 1) + Sigmoid   -> lane-dense (1, bt), no transpose needed.
    z = jnp.dot(w4_ref[...], h.astype(cd), preferred_element_type=jnp.float32) + b4_ref[...]
    o_ref[...] = jax.nn.sigmoid(z).astype(o_ref.dtype)


def _round_up(x, m):
    return ((x + m - 1) // m) * m


def _cdiv(a, b):
    return (a + b - 1) // b


def _choose_tiling(B, max_tile=8192):
    """Pick (batch_tile, num_tiles).

    * Batch is the lane axis of every in-kernel tensor, so tiles are multiples of 128.
    * Single tile whenever the padded batch fits the cap (no pointless split on the
      single-TensorCore v5e/v6e chips).
    * When splitting, keep the grid-step count even so dimension_semantics=("parallel",)
      shards the batch axis evenly across v7x's two TensorCores.
    * max_tile=8192 keeps per-step VMEM (double-buffered x tile + f32/bf16 activations
      + output row) around ~8 MiB -- inside v5e's 16 MiB default scoped VMEM and well
      inside v6e/v7x's 32 MiB.
    """
    B128 = _round_up(max(B, 1), 128)
    if B128 <= max_tile:
        return B128, 1
    nt = _cdiv(B128, max_tile)
    nt += nt % 2                       # even step count for v7x's two TCs
    bt = _round_up(_cdiv(B128, nt), 128)
    nt = _cdiv(B128, bt)
    nt += nt % 2
    return bt, nt


def alarmnet_forward(x, params, *, max_batch_tile=8192, compute_dtype=jnp.bfloat16):
    """AlarmNet forward pass via a single fused Pallas kernel.

    x      : (B, F) float32
    params : dict with w1..w4 in PyTorch layout (out, in) and b1..b4 as (out,)
    returns: (B, 1) float32 in [0, 1]   (matches nn.Sigmoid output)
    """
    B, F = x.shape
    w1, b1 = params["w1"], params["b1"]
    w2, b2 = params["w2"], params["b2"]
    w3, b3 = params["w3"], params["b3"]
    w4, b4 = params["w4"], params["b4"]
    H1, H2, H3 = w1.shape[0], w2.shape[0], w3.shape[0]

    batch_tile, num_tiles = _choose_tiling(B, max_batch_tile)
    B_padded = batch_tile * num_tiles

    # Single wrapper pass over x: transpose to batch-on-lanes layout and pad the lane
    # axis to the tile multiple (fused into one XLA op). Stays f32; bf16 cast is in-kernel.
    x_t = jnp.transpose(x)                                       # (F, B)
    if B_padded != B:
        x_t = jnp.pad(x_t, ((0, 0), (0, B_padded - B)))          # (F, B_padded)

    # Weights bf16 (tiny, VMEM-resident); biases f32 as (out, 1) columns (broadcast on lanes).
    w1c = w1.astype(compute_dtype)
    w2c = w2.astype(compute_dtype)
    w3c = w3.astype(compute_dtype)
    w4c = w4.astype(compute_dtype)                               # (1, H3)
    b1c = b1.reshape(H1, 1).astype(jnp.float32)
    b2c = b2.reshape(H2, 1).astype(jnp.float32)
    b3c = b3.reshape(H3, 1).astype(jnp.float32)
    b4c = b4.reshape(1, 1).astype(jnp.float32)

    # Weights/biases: block == full array, constant index_map -> fetched once, resident
    # across every grid step. Streaming DMA is x only.
    full = lambda shape: pl.BlockSpec(shape, lambda i: (0, 0))

    w_itemsize = jnp.dtype(compute_dtype).itemsize
    flops = 2 * B_padded * (F * H1 + H1 * H2 + H2 * H3 + H3 * 1)
    bytes_accessed = (
        x_t.size * 4
        + (w1c.size + w2c.size + w3c.size + w4c.size) * w_itemsize
        + (b1c.size + b2c.size + b3c.size + b4c.size) * 4
        + B_padded * 4
    )

    out = pl.pallas_call(
        _alarmnet_kernel,
        out_shape=jax.ShapeDtypeStruct((1, B_padded), jnp.float32),
        grid_spec=pltpu.PrefetchScalarGridSpec(
            num_scalar_prefetch=0,
            grid=(num_tiles,),
            in_specs=[
                pl.BlockSpec((F, batch_tile), lambda i: (0, i)),   # streamed x tile (f32)
                full((H1, F)), full((H1, 1)),
                full((H2, H1)), full((H2, 1)),
                full((H3, H2)), full((H3, 1)),
                full((1, H3)), full((1, 1)),
            ],
            out_specs=pl.BlockSpec((1, batch_tile), lambda i: (0, i)),  # lane-dense row
        ),
        compiler_params=pltpu.CompilerParams(
            dimension_semantics=("parallel",),
        ),
        cost_estimate=pl.CostEstimate(
            flops=flops,
            transcendentals=B_padded,            # one sigmoid exp per batch element
            bytes_accessed=bytes_accessed,
        ),
    )(x_t, w1c, b1c, w2c, b2c, w3c, b3c, w4c, b4c)

    # (1, B_padded) lane-dense row -> (B, 1) column, matching the PyTorch module's output.
    return out.reshape(B_padded, 1)[:B]


def init_alarmnet_params(key, num_features, hidden_layers=(64, 32, 16)):
    """nn.Linear-style init: U(-1/sqrt(fan_in), 1/sqrt(fan_in)); PyTorch (out, in) layout."""
    dims = [num_features] + list(hidden_layers) + [1]
    params = {}
    for idx in range(len(dims) - 1):
        fan_in, fan_out = dims[idx], dims[idx + 1]
        key, kw, kb = jax.random.split(key, 3)
        bound = 1.0 / jnp.sqrt(jnp.float32(fan_in))
        params[f"w{idx + 1}"] = jax.random.uniform(
            kw, (fan_out, fan_in), jnp.float32, -bound, bound)     # PyTorch Linear.weight layout
        params[f"b{idx + 1}"] = jax.random.uniform(
            kb, (fan_out,), jnp.float32, -bound, bound)
    return params


def alarmnet_reference(x, params, compute_dtype=jnp.float32):
    """Pure-JAX reference (optionally with bf16 matmul inputs, like the kernel)."""
    cd = compute_dtype
    h = x
    for i in range(1, 5):
        w = params[f"w{i}"].astype(cd)                   # (out, in)
        b = params[f"b{i}"].astype(jnp.float32)          # (out,)
        h = jnp.dot(h.astype(cd), w.T, preferred_element_type=jnp.float32) + b
        if i < 4:
            h = jnp.maximum(h, 0.0)
    return jax.nn.sigmoid(h)                             # (B, 1)


if __name__ == "__main__":
    key = jax.random.PRNGKey(0)
    k_param, k_x = jax.random.split(key)

    batch = 10             # not a multiple of 8/128 -> exercises the lane-padding path
    num_features = 32
    hidden_layers = (64, 32, 16)

    params = init_alarmnet_params(k_param, num_features, hidden_layers)
    x = jax.random.normal(k_x, (batch, num_features), dtype=jnp.float32)

    y = alarmnet_forward(x, params)          # bf16 matmul inputs, f32 accumulation
    y = jax.block_until_ready(y)
    assert y.shape == (batch, 1)

    # Reference with the same bf16 rounding of matmul inputs -> tight tolerance.
    y_ref_bf16 = alarmnet_reference(x, params, compute_dtype=jnp.bfloat16)
    # Full-f32 reference -> loose tolerance (bf16 matmul inputs vs f32).
    y_ref_f32 = alarmnet_reference(x, params, compute_dtype=jnp.float32)

    assert jnp.allclose(y, y_ref_bf16, atol=2e-3, rtol=2e-3), "mismatch vs bf16 reference"
    assert jnp.allclose(y, y_ref_f32, atol=2e-2, rtol=2e-2), "mismatch vs f32 reference"
    assert bool(jnp.all((y >= 0.0) & (y <= 1.0)))

    print("KERNEL_OK")
</pallas_src>

<mosaic_0001>
module attributes {stable_mosaic.version = 11 : i64} {
  func.func @_alarmnet_kernel(%arg0: i32, %arg1: memref<32x128xf32, #tpu.memory_space<vmem>>, %arg2: memref<64x32xbf16, #tpu.memory_space<vmem>>, %arg3: memref<64x1xf32, #tpu.memory_space<vmem>>, %arg4: memref<32x64xbf16, #tpu.memory_space<vmem>>, %arg5: memref<32x1xf32, #tpu.memory_space<vmem>>, %arg6: memref<16x32xbf16, #tpu.memory_space<vmem>>, %arg7: memref<16x1xf32, #tpu.memory_space<vmem>>, %arg8: memref<1x16xbf16, #tpu.memory_space<vmem>>, %arg9: memref<1x1xf32, #tpu.memory_space<vmem>>, %arg10: memref<1x128xf32, #tpu.memory_space<vmem>>) attributes {dimension_semantics = [#tpu.dimension_semantics<parallel>], iteration_bounds = array<i64: 1>, scalar_prefetch = 0 : i64, scratch_operands = 0 : i64, tpu.core_type = #tpu.core_type<tc>, window_params = [{transform_indices = @transform_0, window_bounds = array<i64: 32, 128>}, {pipeline_mode = #tpu.pipeline_mode<synchronous>, transform_indices = @transform_1, window_bounds = array<i64: 64, 32>}, {pipeline_mode = #tpu.pipeline_mode<synchronous>, transform_indices = @transform_2, window_bounds = array<i64: 64, 1>}, {pipeline_mode = #tpu.pipeline_mode<synchronous>, transform_indices = @transform_3, window_bounds = array<i64: 32, 64>}, {pipeline_mode = #tpu.pipeline_mode<synchronous>, transform_indices = @transform_4, window_bounds = array<i64: 32, 1>}, {pipeline_mode = #tpu.pipeline_mode<synchronous>, transform_indices = @transform_5, window_bounds = array<i64: 16, 32>}, {pipeline_mode = #tpu.pipeline_mode<synchronous>, transform_indices = @transform_6, window_bounds = array<i64: 16, 1>}, {pipeline_mode = #tpu.pipeline_mode<synchronous>, transform_indices = @transform_7, window_bounds = array<i64: 1, 16>}, {pipeline_mode = #tpu.pipeline_mode<synchronous>, transform_indices = @transform_8, window_bounds = array<i64: 1, 1>}, {transform_indices = @transform_9, window_bounds = array<i64: 1, 128>}]} {
    %c0 = arith.constant 0 : index
    %c0_0 = arith.constant 0 : index
    %0 = vector.load %arg1[%c0, %c0_0] : memref<32x128xf32, #tpu.memory_space<vmem>>, vector<32x128xf32>
    %1 = arith.truncf %0 : vector<32x128xf32> to vector<32x128xbf16>
    %c0_1 = arith.constant 0 : index
    %c0_2 = arith.constant 0 : index
    %2 = vector.load %arg2[%c0_1, %c0_2] : memref<64x32xbf16, #tpu.memory_space<vmem>>, vector<64x32xbf16>
    %cst = arith.constant dense<0.000000e+00> : vector<64x128xf32>
    %3 = tpu.matmul %2, %1, %cst {dimension_numbers = #tpu.dot_dimension_numbers<[1], [0], [0], [1], [0, 0, 1, 1], [], []>} : vector<64x32xbf16>, vector<32x128xbf16>, vector<64x128xf32> -> vector<64x128xf32>
    %c0_3 = arith.constant 0 : index
    %c0_4 = arith.constant 0 : index
    %4 = vector.load %arg3[%c0_3, %c0_4] : memref<64x1xf32, #tpu.memory_space<vmem>>, vector<64x1xf32>
    %5 = vector.broadcast %4 : vector<64x1xf32> to vector<64x128xf32>
    %6 = arith.addf %3, %5 : vector<64x128xf32>
    %cst_5 = arith.constant 0.000000e+00 : f32
    %7 = vector.broadcast %cst_5 : f32 to vector<64x128xf32>
    %8 = arith.maximumf %6, %7 : vector<64x128xf32>
    %c0_6 = arith.constant 0 : index
    %c0_7 = arith.constant 0 : index
    %9 = vector.load %arg4[%c0_6, %c0_7] : memref<32x64xbf16, #tpu.memory_space<vmem>>, vector<32x64xbf16>
    %10 = arith.truncf %8 : vector<64x128xf32> to vector<64x128xbf16>
    %cst_8 = arith.constant dense<0.000000e+00> : vector<32x128xf32>
    %11 = tpu.matmul %9, %10, %cst_8 {dimension_numbers = #tpu.dot_dimension_numbers<[1], [0], [0], [1], [0, 0, 1, 1], [], []>} : vector<32x64xbf16>, vector<64x128xbf16>, vector<32x128xf32> -> vector<32x128xf32>
    %c0_9 = arith.constant 0 : index
    %c0_10 = arith.constant 0 : index
    %12 = vector.load %arg5[%c0_9, %c0_10] : memref<32x1xf32, #tpu.memory_space<vmem>>, vector<32x1xf32>
    %13 = vector.broadcast %12 : vector<32x1xf32> to vector<32x128xf32>
    %14 = arith.addf %11, %13 : vector<32x128xf32>
    %cst_11 = arith.constant 0.000000e+00 : f32
    %15 = vector.broadcast %cst_11 : f32 to vector<32x128xf32>
    %16 = arith.maximumf %14, %15 : vector<32x128xf32>
    %c0_12 = arith.constant 0 : index
    %c0_13 = arith.constant 0 : index
    %17 = vector.load %arg6[%c0_12, %c0_13] : memref<16x32xbf16, #tpu.memory_space<vmem>>, vector<16x32xbf16>
    %18 = arith.truncf %16 : vector<32x128xf32> to vector<32x128xbf16>
    %cst_14 = arith.constant dense<0.000000e+00> : vector<16x128xf32>
    %19 = tpu.matmul %17, %18, %cst_14 {dimension_numbers = #tpu.dot_dimension_numbers<[1], [0], [0], [1], [0, 0, 1, 1], [], []>} : vector<16x32xbf16>, vector<32x128xbf16>, vector<16x128xf32> -> vector<16x128xf32>
    %c0_15 = arith.constant 0 : index
    %c0_16 = arith.constant 0 : index
    %20 = vector.load %arg7[%c0_15, %c0_16] : memref<16x1xf32, #tpu.memory_space<vmem>>, vector<16x1xf32>
    %21 = vector.broadcast %20 : vector<16x1xf32> to vector<16x128xf32>
    %22 = arith.addf %19, %21 : vector<16x128xf32>
    %cst_17 = arith.constant 0.000000e+00 : f32
    %23 = vector.broadcast %cst_17 : f32 to vector<16x128xf32>
    %24 = arith.maximumf %22, %23 : vector<16x128xf32>
    %c0_18 = arith.constant 0 : index
    %c0_19 = arith.constant 0 : index
    %25 = vector.load %arg8[%c0_18, %c0_19] : memref<1x16xbf16, #tpu.memory_space<vmem>>, vector<1x16xbf16>
    %26 = arith.truncf %24 : vector<16x128xf32> to vector<16x128xbf16>
    %cst_20 = arith.constant dense<0.000000e+00> : vector<1x128xf32>
    %27 = tpu.matmul %25, %26, %cst_20 {dimension_numbers = #tpu.dot_dimension_numbers<[1], [0], [0], [1], [0, 0, 1, 1], [], []>} : vector<1x16xbf16>, vector<16x128xbf16>, vector<1x128xf32> -> vector<1x128xf32>
    %c0_21 = arith.constant 0 : index
    %c0_22 = arith.constant 0 : index
    %28 = vector.load %arg9[%c0_21, %c0_22] : memref<1x1xf32, #tpu.memory_space<vmem>>, vector<1x1xf32>
    %29 = vector.broadcast %28 : vector<1x1xf32> to vector<1x128xf32>
    %30 = arith.addf %27, %29 : vector<1x128xf32>
    %31 = arith.negf %30 : vector<1x128xf32>
    %32 = math.exp %31 : vector<1x128xf32>
    %cst_23 = arith.constant 1.000000e+00 : f32
    %33 = vector.broadcast %cst_23 : f32 to vector<1x128xf32>
    %34 = arith.addf %33, %32 : vector<1x128xf32>
    %35 = arith.divf %33, %34 : vector<1x128xf32>
    %c0_24 = arith.constant 0 : index
    %c0_25 = arith.constant 0 : index
    %36 = vector.load %arg10[%c0_24, %c0_25] : memref<1x128xf32, #tpu.memory_space<vmem>>, vector<1x128xf32>
    tpu.vector_store %arg10[%c0_24, %c0_25], %35 {strides = array<i32>} : memref<1x128xf32, #tpu.memory_space<vmem>>, vector<1x128xf32>,
    return
  }
  func.func @transform_0(%arg0: i32) -> (i32, i32) {
    %c0_i32 = arith.constant 0 : i32
    %c0_i32_0 = arith.constant 0 : i32
    return %c0_i32, %arg0 : i32, i32
  }
  func.func @transform_1(%arg0: i32) -> (i32, i32) {
    %c0_i32 = arith.constant 0 : i32
    %c0_i32_0 = arith.constant 0 : i32
    %c0_i32_1 = arith.constant 0 : i32
    return %c0_i32, %c0_i32_0 : i32, i32
  }
  func.func @transform_2(%arg0: i32) -> (i32, i32) {
    %c0_i32 = arith.constant 0 : i32
    %c0_i32_0 = arith.constant 0 : i32
    %c0_i32_1 = arith.constant 0 : i32
    return %c0_i32, %c0_i32_0 : i32, i32
  }
  func.func @transform_3(%arg0: i32) -> (i32, i32) {
    %c0_i32 = arith.constant 0 : i32
    %c0_i32_0 = arith.constant 0 : i32
    %c0_i32_1 = arith.constant 0 : i32
    return %c0_i32, %c0_i32_0 : i32, i32
  }
  func.func @transform_4(%arg0: i32) -> (i32, i32) {
    %c0_i32 = arith.constant 0 : i32
    %c0_i32_0 = arith.constant 0 : i32
    %c0_i32_1 = arith.constant 0 : i32
    return %c0_i32, %c0_i32_0 : i32, i32
  }
  func.func @transform_5(%arg0: i32) -> (i32, i32) {
    %c0_i32 = arith.constant 0 : i32
    %c0_i32_0 = arith.constant 0 : i32
    %c0_i32_1 = arith.constant 0 : i32
    return %c0_i32, %c0_i32_0 : i32, i32
  }
  func.func @transform_6(%arg0: i32) -> (i32, i32) {
    %c0_i32 = arith.constant 0 : i32
    %c0_i32_0 = arith.constant 0 : i32
    %c0_i32_1 = arith.constant 0 : i32
    return %c0_i32, %c0_i32_0 : i32, i32
  }
  func.func @transform_7(%arg0: i32) -> (i32, i32) {
    %c0_i32 = arith.constant 0 : i32
    %c0_i32_0 = arith.constant 0 : i32
    %c0_i32_1 = arith.constant 0 : i32
    return %c0_i32, %c0_i32_0 : i32, i32
  }
  func.func @transform_8(%arg0: i32) -> (i32, i32) {
    %c0_i32 = arith.constant 0 : i32
    %c0_i32_0 = arith.constant 0 : i32
    %c0_i32_1 = arith.constant 0 : i32
    return %c0_i32, %c0_i32_0 : i32, i32
  }
  func.func @transform_9(%arg0: i32) -> (i32, i32) {
    %c0_i32 = arith.constant 0 : i32
    %c0_i32_0 = arith.constant 0 : i32
    return %c0_i32, %arg0 : i32, i32
  }
}

</mosaic_0001>

<llo_original>
// kernel: tpu_custom_call.1
$region0: #{tpu_custom_call.1}
  #allocation0 [shape = 'u32[]', space=smem, size = 0x4, offset = 0x4, fixed_abs, tag = 'smem constant byte address 0x4 - core index']
  #allocation1 [shape = 'u32[144,128]{1,0:T(1,128)}', space=vmem, size = 0x12000, scoped, tag = 'internal scratch']
  #allocation2 [shape = 'f32[1,1]{1,0:T(1,128)S(1)}', space=vmem, size = 0x200, scoped, tag = 'scoped memory for tpu_custom_call.1']
  %s0 = inlined_call_operand.vmem [shape: f32[32,128], index: 0, kind: input, shape index: {}]
  %s1 = inlined_call_operand.vmem [shape: bf16[64,32], index: 1, kind: input, shape index: {}]
  %s2 = inlined_call_operand.vmem [shape: f32[64,1], index: 2, kind: input, shape index: {}]
  %s3 = inlined_call_operand.vmem [shape: bf16[32,64], index: 3, kind: input, shape index: {}]
  %s4 = inlined_call_operand.vmem [shape: f32[32,1], index: 4, kind: input, shape index: {}]
  %s5 = inlined_call_operand.vmem [shape: bf16[16,32], index: 5, kind: input, shape index: {}]
  %s6 = inlined_call_operand.vmem [shape: f32[16,1], index: 6, kind: input, shape index: {}]
  %s7 = inlined_call_operand.vmem [shape: bf16[1,16], index: 7, kind: input, shape index: {}]
  %s8 = inlined_call_operand.<no memory space> [shape: f32[1,1], index: 8, kind: input, shape index: {}]
  %s9 = inlined_call_operand.hbm [shape: f32[1,128], index: 9, kind: output, shape index: {}]
  %s10 = sld [smem:[#allocation0]]
  $region46: #{tpu_custom_call.1} parent=0
    _
  %s12 = ssub.s32 1, %s10
  %s13 = scalar_select 0, %s12, %s10
  %v14 = vstv %s8
  %15 = vst [vmem:[#allocation2] sm:$0x1] %v14
  $region1: #{tpu_custom_call.1} parent=0
    #allocation3 [shape = 'u8[512]{0}', space=vmem, size = 0x400, scoped, tag = 'output window, operand 0, single buffered']
    #allocation4 [shape = 's32[1]{0}', space=sflag, size = 0x4, scoped, tag = 'scoped memory for tpu_custom_call.1']
    %16 = vsyncpa [#allocation4], 0
    // Predicated region
    $region2: #{tpu_custom_call.1} parent=1 // pred_check
      _
    $region3: #{tpu_custom_call.1} parent=1 // pred_check_branch
      %18 = sbr.rel (0) target = $region5
    $region4: #{tpu_custom_call.1} parent=1 // pred_region
      _
    $region5: #{tpu_custom_call.1} parent=1 // pred_fallthru
      _
    // Predicated region
    $region6: #{tpu_custom_call.1} parent=1 // pred_check
      _
    $region7: #{tpu_custom_call.1} parent=1 // pred_check_branch
      %20 = sbr.rel (0) target = $region9
    $region8: #{tpu_custom_call.1} parent=1 // pred_region
      _
    $region9: #{tpu_custom_call.1} parent=1 // pred_fallthru
      _
    // Predicated region
    $region10: #{tpu_custom_call.1} parent=1 // pred_check
      _
    $region11: #{tpu_custom_call.1} parent=1 // pred_check_branch
      %22 = sbr.rel (0) target = $region13
    $region12: #{tpu_custom_call.1} parent=1 // pred_region
      _
    $region13: #{tpu_custom_call.1} parent=1 // pred_fallthru
      _
    // Predicated region
    $region14: #{tpu_custom_call.1} parent=1 // pred_check
      _
    $region15: #{tpu_custom_call.1} parent=1 // pred_check_branch
      %24 = sbr.rel (0) target = $region17
    $region16: #{tpu_custom_call.1} parent=1 // pred_region
      _
    $region17: #{tpu_custom_call.1} parent=1 // pred_fallthru
      _
    // Predicated region
    $region18: #{tpu_custom_call.1} parent=1 // pred_check
      _
    $region19: #{tpu_custom_call.1} parent=1 // pred_check_branch
      %26 = sbr.rel (0) target = $region21
    $region20: #{tpu_custom_call.1} parent=1 // pred_region
      _
    $region21: #{tpu_custom_call.1} parent=1 // pred_fallthru
      _
    // Predicated region
    $region22: #{tpu_custom_call.1} parent=1 // pred_check
      _
    $region23: #{tpu_custom_call.1} parent=1 // pred_check_branch
      %28 = sbr.rel (0) target = $region25
    $region24: #{tpu_custom_call.1} parent=1 // pred_region
      _
    $region25: #{tpu_custom_call.1} parent=1 // pred_fallthru
      _
    // Predicated region
    $region26: #{tpu_custom_call.1} parent=1 // pred_check
      _
    $region27: #{tpu_custom_call.1} parent=1 // pred_check_branch
      %30 = sbr.rel (0) target = $region29
    $region28: #{tpu_custom_call.1} parent=1 // pred_region
      _
    $region29: #{tpu_custom_call.1} parent=1 // pred_fallthru
      _
    // Predicated region
    $region30: #{tpu_custom_call.1} parent=1 // pred_check
      _
    $region31: #{tpu_custom_call.1} parent=1 // pred_check_branch
      %32 = sbr.rel (0) target = $region33
    $region32: #{tpu_custom_call.1} parent=1 // pred_region
      _
    $region33: #{tpu_custom_call.1} parent=1 // pred_fallthru
      _
    // Predicated region
    $region34: #{tpu_custom_call.1} parent=1 // pred_check
      _
    $region35: #{tpu_custom_call.1} parent=1 // pred_check_branch
      %34 = sbr.rel (0) target = $region37
    $region36: #{tpu_custom_call.1} parent=1 // pred_region
      _
    $region37: #{tpu_custom_call.1} parent=1 // pred_fallthru
      _
    %v36 = vld [vmem:[%s0] sm:$0xff]
    %v37 = vld [vmem:[%s0 + $0x8] sm:$0xff]
    %v38 = vld [vmem:[%s0 + $0x10] sm:$0xff]
    %v39 = vld [vmem:[%s0 + $0x18] sm:$0xff]
    %v40 = vpack.c.bf16 %v37, %v36
    %v41 = vpack.c.bf16 %v39, %v38
    %v42 = vld [vmem:[%s1] sm:$0xf]
    %v43 = vld [vmem:[%s1 + $0x4] sm:$0xf]
    %v44 = vld [vmem:[%s1 + $0x8] sm:$0xf]
    %v45 = vld [vmem:[%s1 + $0xc] sm:$0xf]
    %v46 = vld [vmem:[%s1 + $0x10] sm:$0xf]
    %v47 = vld [vmem:[%s1 + $0x14] sm:$0xf]
    %v48 = vld [vmem:[%s1 + $0x18] sm:$0xf]
    %v49 = vld [vmem:[%s1 + $0x1c] sm:$0xf]
    %v50 = vld [vmem:[%s2] sm:$0xff]
    %v51 = vld [vmem:[%s2 + $0x8] sm:$0xff]
    %v52 = vld [vmem:[%s2 + $0x10] sm:$0xff]
    %v53 = vld [vmem:[%s2 + $0x18] sm:$0xff]
    %v54 = vld [vmem:[%s2 + $0x20] sm:$0xff]
    %v55 = vld [vmem:[%s2 + $0x28] sm:$0xff]
    %v56 = vld [vmem:[%s2 + $0x30] sm:$0xff]
    %v57 = vld [vmem:[%s2 + $0x38] sm:$0xff]
    %59 = vset.pattern.permute.xlu0 0
    %60 = vperm.xlu0 %59, %v50
    %v61 = vpop.permute.xlu0 %60
    %64 = vset.pattern.permute.xlu0 0
    %65 = vperm.xlu0 %64, %v51
    %v66 = vpop.permute.xlu0 %65
    %69 = vset.pattern.permute.xlu0 0
    %70 = vperm.xlu0 %69, %v52
    %v71 = vpop.permute.xlu0 %70
    %74 = vset.pattern.permute.xlu0 0
    %75 = vperm.xlu0 %74, %v53
    %v76 = vpop.permute.xlu0 %75
    %79 = vset.pattern.permute.xlu0 0
    %80 = vperm.xlu0 %79, %v54
    %v81 = vpop.permute.xlu0 %80
    %84 = vset.pattern.permute.xlu0 0
    %85 = vperm.xlu0 %84, %v55
    %v86 = vpop.permute.xlu0 %85
    %89 = vset.pattern.permute.xlu0 0
    %90 = vperm.xlu0 %89, %v56
    %v91 = vpop.permute.xlu0 %90
    %94 = vset.pattern.permute.xlu0 0
    %95 = vperm.xlu0 %94, %v57
    %v96 = vpop.permute.xlu0 %95
    %v106 = vunpack.c.l.b16 %v42
    %v107 = vunpack.c.l.b16 %v43
    %v108 = vunpack.c.l.b16 %v44
    %v109 = vunpack.c.l.b16 %v45
    %v110 = vunpack.c.l.b16 %v46
    %v111 = vunpack.c.l.b16 %v47
    %v112 = vunpack.c.l.b16 %v48
    %v113 = vunpack.c.l.b16 %v49
    %v114 = vpack.c.b16 %v107, %v106
    %v115 = vpack.c.b16 %v109, %v108
    %v116 = vpack.c.b16 %v111, %v110
    %v117 = vpack.c.b16 %v113, %v112
    %vm118 = vcmask 261120
    %v120 = vsel %vm118, %v114, 0
    %v123 = vsel %vm118, %v115, 0
    %v126 = vsel %vm118, %v116, 0
    %v129 = vsel %vm118, %v117, 0
    %131 = vmatprep.subr.bf16.mxu0 0
    %132 = vmatpush1.bf16.msra.mxu0 %v40
    %133 = vmatprep.subr.bf16.mxu0 0
    %134 = vmatpush1.bf16.msra.mxu0 %v41
    %135 = vmatprep.subr.bf16.mxu0 0
    %136 = vmatpush1.bf16.msra.mxu0 0
    %137 = vmatprep.subr.bf16.mxu0 0
    %138 = vmatpush1.bf16.msra.mxu0 0
    %139 = vmatprep.subr.bf16.mxu0 0
    %140 = vmatpush1.bf16.msra.mxu0 0
    %141 = vmatprep.subr.bf16.mxu0 0
    %142 = vmatpush1.bf16.msra.mxu0 0
    %143 = vmatprep.subr.bf16.mxu0 0
    %144 = vmatpush1.bf16.msra.mxu0 0
    %145 = vmatprep.subr.bf16.mxu0 0
    %146 = vmatpush1.bf16.msra.mxu0 0
    %147 = vmatprep.subr.bf16.mxu0 0
    %148 = vmatpush1.bf16.msra.mxu0 0
    %149 = vmatprep.subr.bf16.mxu0 0
    %150 = vmatpush1.bf16.msra.mxu0 0
    %151 = vmatprep.subr.bf16.mxu0 0
    %152 = vmatpush1.bf16.msra.mxu0 0
    %153 = vmatprep.subr.bf16.mxu0 0
    %154 = vmatpush1.bf16.msra.mxu0 0
    %155 = vmatprep.subr.bf16.mxu0 0
    %156 = vmatpush1.bf16.msra.mxu0 0
    %157 = vmatprep.subr.bf16.mxu0 0
    %158 = vmatpush1.bf16.msra.mxu0 0
    %159 = vmatprep.subr.bf16.mxu0 0
    %160 = vmatpush1.bf16.msra.mxu0 0
    %161 = vmatprep.subr.bf16.mxu0 0
    %162 = vmatpush1.bf16.msra.mxu0 0
    %163 = vmatprep.mubr.bf16.mxu0 0
    %164 = vmatmul.mubr.bf16.gmra.mrb[0].mxu0 %v120
    %v165 = vpop.f32.mrb[0].mxu0
    %v166 = vadd.f32 %v61, %v165
    %v167 = vpop.f32.mrb[0].mxu0
    %v168 = vpop.f32.mrb[0].mxu0
    %v169 = vadd.f32 %v66, %v168
    %v170 = vpop.f32.mrb[0].mxu0
    %171 = vmatprep.mubr.bf16.mxu0 0
    %172 = vmatmul.mubr.bf16.gmra.mrb[0].mxu0 %v123
    %v173 = vpop.f32.mrb[0].mxu0
    %v174 = vadd.f32 %v71, %v173
    %v175 = vpop.f32.mrb[0].mxu0
    %v176 = vpop.f32.mrb[0].mxu0
    %v177 = vadd.f32 %v76, %v176
    %v178 = vpop.f32.mrb[0].mxu0
    %179 = vmatprep.mubr.bf16.mxu0 0
    %180 = vmatmul.mubr.bf16.gmra.mrb[0].mxu0 %v126
    %v181 = vpop.f32.mrb[0].mxu0
    %v182 = vadd.f32 %v81, %v181
    %v183 = vpop.f32.mrb[0].mxu0
    %v184 = vpop.f32.mrb[0].mxu0
    %v185 = vadd.f32 %v86, %v184
    %v186 = vpop.f32.mrb[0].mxu0
    %187 = vmatprep.mubr.bf16.mxu0 0
    %188 = vmatmul.mubr.bf16.gmra.mrb[0].mxu0 %v129
    %v189 = vpop.f32.mrb[0].mxu0
    %v190 = vadd.f32 %v91, %v189
    %v191 = vpop.f32.mrb[0].mxu0
    %v192 = vpop.f32.mrb[0].mxu0
    %v193 = vadd.f32 %v96, %v192
    %v194 = vpop.f32.mrb[0].mxu0
    %195 = vdwg.mxu0
    %v196 = vmax.f32 %v166, 0.0
    %v197 = vmax.f32 %v169, 0.0
    %v198 = vmax.f32 %v174, 0.0
    %v199 = vmax.f32 %v177, 0.0
    %v200 = vmax.f32 %v182, 0.0
    %v201 = vmax.f32 %v185, 0.0
    %v202 = vmax.f32 %v190, 0.0
    %v203 = vmax.f32 %v193, 0.0
    %v204 = vld [vmem:[%s3] sm:$0xf]
    %v205 = vld [vmem:[%s3 + $0x4] sm:$0xf]
    %v206 = vld [vmem:[%s3 + $0x8] sm:$0xf]
    %v207 = vld [vmem:[%s3 + $0xc] sm:$0xf]
    %v208 = vpack.c.bf16 %v197, %v196
    %v209 = vpack.c.bf16 %v199, %v198
    %v210 = vpack.c.bf16 %v201, %v200
    %v211 = vpack.c.bf16 %v203, %v202
    %v212 = vld [vmem:[%s4] sm:$0xff]
    %v213 = vld [vmem:[%s4 + $0x8] sm:$0xff]
    %v214 = vld [vmem:[%s4 + $0x10] sm:$0xff]
    %v215 = vld [vmem:[%s4 + $0x18] sm:$0xff]
    %217 = vset.pattern.permute.xlu0 0
    %218 = vperm.xlu0 %217, %v212
    %v219 = vpop.permute.xlu0 %218
    %222 = vset.pattern.permute.xlu0 0
    %223 = vperm.xlu0 %222, %v213
    %v224 = vpop.permute.xlu0 %223
    %227 = vset.pattern.permute.xlu0 0
    %228 = vperm.xlu0 %227, %v214
    %v229 = vpop.permute.xlu0 %228
    %232 = vset.pattern.permute.xlu0 0
    %233 = vperm.xlu0 %232, %v215
    %v234 = vpop.permute.xlu0 %233
    %v240 = vunpack.c.l.b16 %v204
    %v241 = vunpack.c.l.b16 %v205
    %v242 = vunpack.c.l.b16 %v206
    %v243 = vunpack.c.l.b16 %v207
    %v244 = vpack.c.b16 %v241, %v240
    %v245 = vpack.c.b16 %v243, %v242
    %vm246 = vcmask 523264
    %v248 = vsel %vm246, %v244, 0
    %v251 = vsel %vm246, %v245, 0
    %253 = vmatprep.subr.bf16.mxu0 0
    %254 = vmatpush1.bf16.msra.mxu0 %v208
    %255 = vmatprep.subr.bf16.mxu0 0
    %256 = vmatpush1.bf16.msra.mxu0 %v209
    %257 = vmatprep.subr.bf16.mxu0 0
    %258 = vmatpush1.bf16.msra.mxu0 %v210
    %259 = vmatprep.subr.bf16.mxu0 0
    %260 = vmatpush1.bf16.msra.mxu0 %v211
    %261 = vmatprep.subr.bf16.mxu0 0
    %262 = vmatpush1.bf16.msra.mxu0 0
    %263 = vmatprep.subr.bf16.mxu0 0
    %264 = vmatpush1.bf16.msra.mxu0 0
    %265 = vmatprep.subr.bf16.mxu0 0
    %266 = vmatpush1.bf16.msra.mxu0 0
    %267 = vmatprep.subr.bf16.mxu0 0
    %268 = vmatpush1.bf16.msra.mxu0 0
    %269 = vmatprep.subr.bf16.mxu0 0
    %270 = vmatpush1.bf16.msra.mxu0 0
    %271 = vmatprep.subr.bf16.mxu0 0
    %272 = vmatpush1.bf16.msra.mxu0 0
    %273 = vmatprep.subr.bf16.mxu0 0
    %274 = vmatpush1.bf16.msra.mxu0 0
    %275 = vmatprep.subr.bf16.mxu0 0
    %276 = vmatpush1.bf16.msra.mxu0 0
    %277 = vmatprep.subr.bf16.mxu0 0
    %278 = vmatpush1.bf16.msra.mxu0 0
    %279 = vmatprep.subr.bf16.mxu0 0
    %280 = vmatpush1.bf16.msra.mxu0 0
    %281 = vmatprep.subr.bf16.mxu0 0
    %282 = vmatpush1.bf16.msra.mxu0 0
    %283 = vmatprep.subr.bf16.mxu0 0
    %284 = vmatpush1.bf16.msra.mxu0 0
    %285 = vmatprep.mubr.bf16.mxu0 0
    %286 = vmatmul.mubr.bf16.gmra.mrb[0].mxu0 %v248
    %v287 = vpop.f32.mrb[0].mxu0
    %v288 = vadd.f32 %v219, %v287
    %v289 = vpop.f32.mrb[0].mxu0
    %v290 = vpop.f32.mrb[0].mxu0
    %v291 = vadd.f32 %v224, %v290
    %v292 = vpop.f32.mrb[0].mxu0
    %293 = vmatprep.mubr.bf16.mxu0 0
    %294 = vmatmul.mubr.bf16.gmra.mrb[0].mxu0 %v251
    %v295 = vpop.f32.mrb[0].mxu0
    %v296 = vadd.f32 %v229, %v295
    %v297 = vpop.f32.mrb[0].mxu0
    %v298 = vpop.f32.mrb[0].mxu0
    %v299 = vadd.f32 %v234, %v298
    %v300 = vpop.f32.mrb[0].mxu0
    %301 = vdwg.mxu0
    %v302 = vmax.f32 %v288, 0.0
    %v303 = vmax.f32 %v291, 0.0
    %v304 = vmax.f32 %v296, 0.0
    %v305 = vmax.f32 %v299, 0.0
    %v306 = vld [vmem:[%s5] sm:$0xf]
    %v307 = vld [vmem:[%s5 + $0x4] sm:$0xf]
    %v308 = vpack.c.bf16 %v303, %v302
    %v309 = vpack.c.bf16 %v305, %v304
    %v310 = vld [vmem:[%s6] sm:$0xff]
    %v311 = vld [vmem:[%s6 + $0x8] sm:$0xff]
    %313 = vset.pattern.permute.xlu0 0
    %314 = vperm.xlu0 %313, %v310
    %v315 = vpop.permute.xlu0 %314
    %318 = vset.pattern.permute.xlu0 0
    %319 = vperm.xlu0 %318, %v311
    %v320 = vpop.permute.xlu0 %319
    %v324 = vunpack.c.l.b16 %v306
    %v325 = vunpack.c.l.b16 %v307
    %v326 = vpack.c.b16 %v325, %v324
    %v328 = vsel %vm118, %v326, 0
    %330 = vmatprep.subr.bf16.mxu0 0
    %331 = vmatpush1.bf16.msra.mxu0 %v308
    %332 = vmatprep.subr.bf16.mxu0 0
    %333 = vmatpush1.bf16.msra.mxu0 %v309
    %334 = vmatprep.subr.bf16.mxu0 0
    %335 = vmatpush1.bf16.msra.mxu0 0
    %336 = vmatprep.subr.bf16.mxu0 0
    %337 = vmatpush1.bf16.msra.mxu0 0
    %338 = vmatprep.subr.bf16.mxu0 0
    %339 = vmatpush1.bf16.msra.mxu0 0
    %340 = vmatprep.subr.bf16.mxu0 0
    %341 = vmatpush1.bf16.msra.mxu0 0
    %342 = vmatprep.subr.bf16.mxu0 0
    %343 = vmatpush1.bf16.msra.mxu0 0
    %344 = vmatprep.subr.bf16.mxu0 0
    %345 = vmatpush1.bf16.msra.mxu0 0
    %346 = vmatprep.subr.bf16.mxu0 0
    %347 = vmatpush1.bf16.msra.mxu0 0
    %348 = vmatprep.subr.bf16.mxu0 0
    %349 = vmatpush1.bf16.msra.mxu0 0
    %350 = vmatprep.subr.bf16.mxu0 0
    %351 = vmatpush1.bf16.msra.mxu0 0
    %352 = vmatprep.subr.bf16.mxu0 0
    %353 = vmatpush1.bf16.msra.mxu0 0
    %354 = vmatprep.subr.bf16.mxu0 0
    %355 = vmatpush1.bf16.msra.mxu0 0
    %356 = vmatprep.subr.bf16.mxu0 0
    %357 = vmatpush1.bf16.msra.mxu0 0
    %358 = vmatprep.subr.bf16.mxu0 0
    %359 = vmatpush1.bf16.msra.mxu0 0
    %360 = vmatprep.subr.bf16.mxu0 0
    %361 = vmatpush1.bf16.msra.mxu0 0
    %362 = vmatprep.mubr.bf16.mxu0 0
    %363 = vmatmul.mubr.bf16.gmra.mrb[0].mxu0 %v328
    %v364 = vpop.f32.mrb[0].mxu0
    %v365 = vadd.f32 %v315, %v364
    %v366 = vpop.f32.mrb[0].mxu0
    %v367 = vpop.f32.mrb[0].mxu0
    %v368 = vadd.f32 %v320, %v367
    %v369 = vpop.f32.mrb[0].mxu0
    %370 = vdwg.mxu0
    %v371 = vmax.f32 %v365, 0.0
    %v372 = vmax.f32 %v368, 0.0
    %v373 = vld [vmem:[%s7] sm:$0x1]
    %v374 = vpack.c.bf16 %v372, %v371
    %v375 = vld [vmem:[#allocation2] sm:$0x1]
    %377 = vset.pattern.permute.xlu0 0
    %378 = vperm.xlu0 %377, %v375
    %v379 = vpop.permute.xlu0 %378
    %v381 = vlaneseq
    %v382 = vshrl.u32 %v381, 7
    %v383 = vsub.s32 0, %v382
    %v384 = vrot.slane %v379, %v383
    %vm385 = vcmask 130048
    %v387 = vsel %vm385, %v373, 0
    %389 = vmatprep.subr.bf16.mxu0 0
    %390 = vmatpush1.bf16.msra.mxu0 %v374
    %391 = vmatprep.subr.bf16.mxu0 0
    %392 = vmatpush1.bf16.msra.mxu0 0
    %393 = vmatprep.subr.bf16.mxu0 0
    %394 = vmatpush1.bf16.msra.mxu0 0
    %395 = vmatprep.subr.bf16.mxu0 0
    %396 = vmatpush1.bf16.msra.mxu0 0
    %397 = vmatprep.subr.bf16.mxu0 0
    %398 = vmatpush1.bf16.msra.mxu0 0
    %399 = vmatprep.subr.bf16.mxu0 0
    %400 = vmatpush1.bf16.msra.mxu0 0
    %401 = vmatprep.subr.bf16.mxu0 0
    %402 = vmatpush1.bf16.msra.mxu0 0
    %403 = vmatprep.subr.bf16.mxu0 0
    %404 = vmatpush1.bf16.msra.mxu0 0
    %405 = vmatprep.subr.bf16.mxu0 0
    %406 = vmatpush1.bf16.msra.mxu0 0
    %407 = vmatprep.subr.bf16.mxu0 0
    %408 = vmatpush1.bf16.msra.mxu0 0
    %409 = vmatprep.subr.bf16.mxu0 0
    %410 = vmatpush1.bf16.msra.mxu0 0
    %411 = vmatprep.subr.bf16.mxu0 0
    %412 = vmatpush1.bf16.msra.mxu0 0
    %413 = vmatprep.subr.bf16.mxu0 0
    %414 = vmatpush1.bf16.msra.mxu0 0
    %415 = vmatprep.subr.bf16.mxu0 0
    %416 = vmatpush1.bf16.msra.mxu0 0
    %417 = vmatprep.subr.bf16.mxu0 0
    %418 = vmatpush1.bf16.msra.mxu0 0
    %419 = vmatprep.subr.bf16.mxu0 0
    %420 = vmatpush1.bf16.msra.mxu0 0
    %421 = vmatprep.mubr.bf16.mxu0 0
    %422 = vmatmul.mubr.bf16.gmra.mrb[0].mxu0 %v387
    %v423 = vpop.f32.mrb[0].mxu0
    %v424 = vadd.f32 %v384, %v423
    %v425 = vpop.f32.mrb[0].mxu0
    %v426 = vpop.f32.mrb[0].mxu0
    %v427 = vpop.f32.mrb[0].mxu0
    %428 = vdwg.mxu0
    %v429 = vxor.u32 %v424, 2147483648
    %v430 = vmul.f32 %v429, 1.442695
    %v431 = vpow.pop %v430
    %v432 = vadd.f32 %v431, 1.0
    %v433 = vrcp.pop %v432
    %v434 = vmul.f32 1.0, %v433
    %435 = vst [vmem:[#allocation3] sm:$0x1] %v434
    // Predicated region
    $region38: #{tpu_custom_call.1} parent=1 // pred_check
      _
    $region39: #{tpu_custom_call.1} parent=1 // pred_check_branch
      %437 = sbr.rel (0) target = $region41
    $region40: #{tpu_custom_call.1} parent=1 // pred_region
      %s439 = ssub.s32 16, 16
      %440 = vsyncadd [#allocation4], %s439
      %s442 = sshll.u32 [#allocation3], 4
      %s443 = int_to_ptr.vmem [resolvable:$true] %s442
      %445 = dma.vmem_to_hbm [thread:$0]  %s443, 16, %s9, [#allocation4]
    $region41: #{tpu_custom_call.1} parent=1 // pred_fallthru
      _
    // Predicated region
    $region42: #{tpu_custom_call.1} parent=1 // pred_check
      _
    $region43: #{tpu_custom_call.1} parent=1 // pred_check_branch
      %447 = sbr.rel (0) target = $region45
    $region44: #{tpu_custom_call.1} parent=1 // pred_region
      %448 = dma.done [#allocation4], 16
    $region45: #{tpu_custom_call.1} parent=1 // pred_fallthru
      _
    %449 = vsyncpa [#allocation4], 1

</llo_original>
